<compile_context>
chip_gen: v6e
topology: v6e:2x2x1
jax: 0.10.0
libtpu: 0.0.40
codegen_flags: <defaults>
</compile_context>

<pallas_src>
import jax
import jax.numpy as jnp
from jax.experimental import pallas as pl
from jax.experimental.pallas import tpu as pltpu


def _make_kernel(bt):
    def kernel(seq_ref, q_ref, w_ref, b_ref, out_ref, attn_ref):
        # seq_ref : (bt, D, S_t)  sequence tile in PyTorch (B, C=D, S) layout, f32
        # q_ref   : (bt, 1, D)    per-batch query rows (precomputed in the wrapper), f32
        # w_ref   : (D, D)        sequence_linear weight, native (out, in) layout, f32
        # b_ref   : (D, 1)        sequence_linear bias as a column, f32
        # out_ref : (bt, D, S_t)  (y * attn)^T, already in PyTorch output layout
        # attn_ref: (bt, 1, S_t)  sigmoid attention weights, lane-dense
        w = w_ref[...]
        bias = b_ref[...]
        for i in range(bt):                                   # static, bt <= 8, unrolled
            x = seq_ref[i]                                    # (D, S_t)
            # y^T = W_seq @ x + b : MXU matmul, f32 operands / f32 accumulation.
            yT = jnp.dot(w, x, preferred_element_type=jnp.float32) + bias   # (D, S_t)
            # attn[s] = sigmoid(q . y^T[:, s]) : M=1 matmul on the otherwise-idle MXU.
            logits = jnp.dot(q_ref[i], yT, preferred_element_type=jnp.float32)  # (1, S_t)
            attn = 1.0 / (1.0 + jnp.exp(-logits))             # sigmoid, exact
            out_ref[i] = (yT * attn).astype(out_ref.dtype)
            attn_ref[i] = attn.astype(attn_ref.dtype)
    return kernel


def _pick_s_tile(S, max_tile=2048):
    """Returns (s_tile, S_padded). Tile is full-S or a 128-multiple; never a huge fallback."""
    if S <= max_tile:
        return S, S                       # single full-extent tile (no (8,128) issue)
    S_pad = -(-S // 128) * 128            # pad to a lane multiple in the wrapper
    for t in range(max_tile, 127, -128):
        if S_pad % t == 0:
            return t, S_pad
    return 128, S_pad                     # unreachable: 128 always divides S_pad


def _pick_batch_tile(B, s_steps, s_tile, D, itemsize=4, max_bt=8):
    """Batches packed per grid step (only when the whole sequence fits one S tile)."""
    if s_steps > 1 or B <= 1:
        return 1
    budget_elems = (2 * 1024 * 1024) // itemsize              # keep each block <= ~2 MiB
    cap = min(max_bt, max(1, budget_elems // (D * s_tile)))
    best = 1
    for bt in range(1, min(B, cap) + 1):
        if B % bt == 0 and B // bt >= 2:                      # keep >=2 steps for v7x TCs
            best = bt
    return best


def sigmoid_dot_attention(sequence, ava_emb, w_seq, b_seq, w_emb, b_emb):
    """Inputs in PyTorch layout: sequence (B, dim, S), ava_emb (B, E).

    Returns (output (B, dim, S), attn (B, S, 1)) matching the PyTorch module.
    """
    B, D, S = sequence.shape

    # Hoisted embedding projection: one tiny full-precision XLA matmul for the whole batch.
    q = jnp.einsum('be,de->bd', ava_emb, w_emb,
                   precision=jax.lax.Precision.HIGHEST,
                   preferred_element_type=jnp.float32) + b_emb           # (B, D)
    q = q.astype(jnp.float32).reshape(B, 1, D)                           # lane-dense rows

    w = w_seq.astype(jnp.float32)                                        # (D, D)
    b_col = b_seq.astype(jnp.float32).reshape(D, 1)                      # (D, 1)

    s_tile, S_pad = _pick_s_tile(S)
    seq_in = sequence
    if S_pad != S:
        seq_in = jnp.pad(sequence, ((0, 0), (0, 0), (0, S_pad - S)))
    s_steps = S_pad // s_tile
    bt = _pick_batch_tile(B, s_steps, s_tile, D, jnp.dtype(sequence.dtype).itemsize)
    grid = (B // bt, s_steps)

    out_p, attn_p = pl.pallas_call(
        _make_kernel(bt),
        out_shape=(jax.ShapeDtypeStruct((B, D, S_pad), sequence.dtype),
                   jax.ShapeDtypeStruct((B, 1, S_pad), sequence.dtype)),
        grid_spec=pltpu.PrefetchScalarGridSpec(
            num_scalar_prefetch=0,
            grid=grid,
            in_specs=[
                pl.BlockSpec((bt, D, s_tile), lambda b, s: (b, 0, s)),   # sequence tile
                pl.BlockSpec((bt, 1, D),      lambda b, s: (b, 0, 0)),   # q rows (per batch-group)
                pl.BlockSpec((D, D),          lambda b, s: (0, 0)),      # W_seq (resident)
                pl.BlockSpec((D, 1),          lambda b, s: (0, 0)),      # bias (resident)
            ],
            out_specs=[
                pl.BlockSpec((bt, D, s_tile), lambda b, s: (b, 0, s)),   # output (B, D, S)
                pl.BlockSpec((bt, 1, s_tile), lambda b, s: (b, 0, s)),   # attn, lane-dense
            ],
        ),
        compiler_params=pltpu.CompilerParams(
            dimension_semantics=("parallel", "parallel")),
    )(seq_in, q, w, b_col)

    if S_pad != S:
        out_p = out_p[..., :S]
        attn_p = attn_p[..., :S]
    # (B, 1, S) -> (B, S, 1): identical linear order, so this reshape is free.
    attn = attn_p.reshape(B, S, 1)
    return out_p, attn


def reference_forward(sequence, ava_emb, w_seq, b_seq, w_emb, b_emb):
    """Plain-JAX f32 reference mirroring the PyTorch forward (HIGHEST precision matmuls)."""
    hp = jax.lax.Precision.HIGHEST
    x = jnp.transpose(sequence, (0, 2, 1))                               # (B, S, D)
    y = jnp.einsum('bsd,kd->bsk', x, w_seq, precision=hp,
                   preferred_element_type=jnp.float32) + b_seq           # (B, S, D)
    q = jnp.einsum('be,de->bd', ava_emb, w_emb, precision=hp,
                   preferred_element_type=jnp.float32) + b_emb           # (B, D)
    attn = jax.nn.sigmoid(jnp.einsum('bsd,bd->bs', y, q, precision=hp,
                                     preferred_element_type=jnp.float32))[..., None]
    out = y * attn
    return (jnp.transpose(out, (0, 2, 1)).astype(sequence.dtype),
            attn.astype(sequence.dtype))


def _run_case(key, B, D, E, S):
    k_seq, k_ava, k_ws, k_bs, k_we, k_be = jax.random.split(key, 6)
    sequence = jax.random.normal(k_seq, (B, D, S), dtype=jnp.float32)    # (B, C, S)
    ava_emb = jax.random.normal(k_ava, (B, E), dtype=jnp.float32)        # (B, E)

    # PyTorch nn.Linear-style init: U(-1/sqrt(fan_in), +1/sqrt(fan_in)).
    ks = 1.0 / jnp.sqrt(jnp.float32(D))
    ke = 1.0 / jnp.sqrt(jnp.float32(E))
    w_seq = jax.random.uniform(k_ws, (D, D), jnp.float32, -ks, ks)
    b_seq = jax.random.uniform(k_bs, (D,),   jnp.float32, -ks, ks)
    w_emb = jax.random.uniform(k_we, (D, E), jnp.float32, -ke, ke)
    b_emb = jax.random.uniform(k_be, (D,),   jnp.float32, -ke, ke)

    out, attn = jax.jit(sigmoid_dot_attention)(sequence, ava_emb,
                                               w_seq, b_seq, w_emb, b_emb)
    jax.block_until_ready((out, attn))
    assert out.shape == (B, D, S) and attn.shape == (B, S, 1)

    ref_out, ref_attn = reference_forward(sequence, ava_emb, w_seq, b_seq, w_emb, b_emb)
    # Tolerance covers the MXU's internal f32 rounding behaviour on any TPU generation.
    assert jnp.allclose(out, ref_out, atol=2e-2, rtol=2e-2), \
        float(jnp.max(jnp.abs(out - ref_out)))
    assert jnp.allclose(attn, ref_attn, atol=2e-2, rtol=2e-2), \
        float(jnp.max(jnp.abs(attn - ref_attn)))


if __name__ == "__main__":
    key = jax.random.PRNGKey(0)
    k0, k1 = jax.random.split(key)
    # Module defaults: dim=128, embedding_dim=512, short sequence (bt=1 keeps 2 grid steps).
    _run_case(k0, B=2, D=128, E=512, S=16)
    # Larger batch, non-128-multiple sequence length: exercises bt>1 batch packing.
    _run_case(k1, B=8, D=128, E=512, S=48)
    print("KERNEL_OK")
</pallas_src>

<mosaic_0001>
module attributes {stable_mosaic.version = 11 : i64} {
  func.func @kernel(%arg0: i32, %arg1: i32, %arg2: memref<1x128x16xf32, #tpu.memory_space<vmem>>, %arg3: memref<1x1x128xf32, #tpu.memory_space<vmem>>, %arg4: memref<128x128xf32, #tpu.memory_space<vmem>>, %arg5: memref<128x1xf32, #tpu.memory_space<vmem>>, %arg6: memref<1x128x16xf32, #tpu.memory_space<vmem>>, %arg7: memref<1x1x16xf32, #tpu.memory_space<vmem>>) attributes {dimension_semantics = [#tpu.dimension_semantics<parallel>, #tpu.dimension_semantics<parallel>], iteration_bounds = array<i64: 2, 1>, scalar_prefetch = 0 : i64, scratch_operands = 0 : i64, tpu.core_type = #tpu.core_type<tc>, window_params = [{transform_indices = @transform_0, window_bounds = array<i64: 1, 128, 16>}, {transform_indices = @transform_1, window_bounds = array<i64: 1, 1, 128>}, {pipeline_mode = #tpu.pipeline_mode<synchronous>, transform_indices = @transform_2, window_bounds = array<i64: 128, 128>}, {pipeline_mode = #tpu.pipeline_mode<synchronous>, transform_indices = @transform_3, window_bounds = array<i64: 128, 1>}, {transform_indices = @transform_4, window_bounds = array<i64: 1, 128, 16>}, {transform_indices = @transform_5, window_bounds = array<i64: 1, 1, 16>}]} {
    %c0 = arith.constant 0 : index
    %c0_0 = arith.constant 0 : index
    %0 = vector.load %arg4[%c0, %c0_0] : memref<128x128xf32, #tpu.memory_space<vmem>>, vector<128x128xf32>
    %c0_1 = arith.constant 0 : index
    %c0_2 = arith.constant 0 : index
    %1 = vector.load %arg5[%c0_1, %c0_2] : memref<128x1xf32, #tpu.memory_space<vmem>>, vector<128x1xf32>
    %c0_3 = arith.constant 0 : index
    %c0_4 = arith.constant 0 : index
    %c0_5 = arith.constant 0 : index
    %2 = vector.load %arg2[%c0_3, %c0_4, %c0_5] : memref<1x128x16xf32, #tpu.memory_space<vmem>>, vector<1x128x16xf32>
    %3 = vector.shape_cast %2 : vector<1x128x16xf32> to vector<128x16xf32>
    %cst = arith.constant dense<0.000000e+00> : vector<128x16xf32>
    %4 = tpu.matmul %0, %3, %cst {dimension_numbers = #tpu.dot_dimension_numbers<[1], [0], [0], [1], [0, 0, 1, 1], [], []>} : vector<128x128xf32>, vector<128x16xf32>, vector<128x16xf32> -> vector<128x16xf32>
    %5 = vector.broadcast %1 : vector<128x1xf32> to vector<128x16xf32>
    %6 = arith.addf %4, %5 : vector<128x16xf32>
    %c0_6 = arith.constant 0 : index
    %c0_7 = arith.constant 0 : index
    %c0_8 = arith.constant 0 : index
    %7 = vector.load %arg3[%c0_6, %c0_7, %c0_8] : memref<1x1x128xf32, #tpu.memory_space<vmem>>, vector<1x1x128xf32>
    %8 = vector.shape_cast %7 : vector<1x1x128xf32> to vector<1x128xf32>
    %cst_9 = arith.constant dense<0.000000e+00> : vector<1x16xf32>
    %9 = tpu.matmul %8, %6, %cst_9 {dimension_numbers = #tpu.dot_dimension_numbers<[1], [0], [0], [1], [0, 0, 1, 1], [], []>} : vector<1x128xf32>, vector<128x16xf32>, vector<1x16xf32> -> vector<1x16xf32>
    %cst_10 = arith.constant 0.000000e+00 : f32
    %10 = vector.broadcast %cst_10 : f32 to vector<1x16xf32>
    %11 = arith.subf %10, %9 : vector<1x16xf32>
    %12 = math.exp %11 : vector<1x16xf32>
    %cst_11 = arith.constant 1.000000e+00 : f32
    %13 = vector.broadcast %cst_11 : f32 to vector<1x16xf32>
    %14 = arith.addf %13, %12 : vector<1x16xf32>
    %cst_12 = arith.constant 1.000000e+00 : f32
    %15 = vector.broadcast %cst_12 : f32 to vector<1x16xf32>
    %16 = arith.divf %15, %14 : vector<1x16xf32>
    %17 = vector.broadcast %16 : vector<1x16xf32> to vector<128x16xf32>
    %18 = arith.mulf %6, %17 : vector<128x16xf32>
    %c0_13 = arith.constant 0 : index
    %c0_14 = arith.constant 0 : index
    %c0_15 = arith.constant 0 : index
    %19 = vector.load %arg6[%c0_13, %c0_14, %c0_15] : memref<1x128x16xf32, #tpu.memory_space<vmem>>, vector<1x128x16xf32>
    %20 = vector.shape_cast %19 : vector<1x128x16xf32> to vector<128x16xf32>
    %21 = vector.shape_cast %18 : vector<128x16xf32> to vector<1x128x16xf32>
    tpu.vector_store %arg6[%c0_13, %c0_14, %c0_15], %21 {strides = array<i32>} : memref<1x128x16xf32, #tpu.memory_space<vmem>>, vector<1x128x16xf32>,
    %c0_16 = arith.constant 0 : index
    %c0_17 = arith.constant 0 : index
    %c0_18 = arith.constant 0 : index
    %22 = vector.load %arg7[%c0_16, %c0_17, %c0_18] : memref<1x1x16xf32, #tpu.memory_space<vmem>>, vector<1x1x16xf32>
    %23 = vector.shape_cast %22 : vector<1x1x16xf32> to vector<1x16xf32>
    %24 = vector.shape_cast %16 : vector<1x16xf32> to vector<1x1x16xf32>
    tpu.vector_store %arg7[%c0_16, %c0_17, %c0_18], %24 {strides = array<i32>} : memref<1x1x16xf32, #tpu.memory_space<vmem>>, vector<1x1x16xf32>,
    return
  }
  func.func @transform_0(%arg0: i32, %arg1: i32) -> (i32, i32, i32) {
    %c0_i32 = arith.constant 0 : i32
    %c0_i32_0 = arith.constant 0 : i32
    return %arg0, %c0_i32, %arg1 : i32, i32, i32
  }
  func.func @transform_1(%arg0: i32, %arg1: i32) -> (i32, i32, i32) {
    %c0_i32 = arith.constant 0 : i32
    %c0_i32_0 = arith.constant 0 : i32
    %c0_i32_1 = arith.constant 0 : i32
    return %arg0, %c0_i32, %c0_i32_0 : i32, i32, i32
  }
  func.func @transform_2(%arg0: i32, %arg1: i32) -> (i32, i32) {
    %c0_i32 = arith.constant 0 : i32
    %c0_i32_0 = arith.constant 0 : i32
    %c0_i32_1 = arith.constant 0 : i32
    return %c0_i32, %c0_i32_0 : i32, i32
  }
  func.func @transform_3(%arg0: i32, %arg1: i32) -> (i32, i32) {
    %c0_i32 = arith.constant 0 : i32
    %c0_i32_0 = arith.constant 0 : i32
    %c0_i32_1 = arith.constant 0 : i32
    return %c0_i32, %c0_i32_0 : i32, i32
  }
  func.func @transform_4(%arg0: i32, %arg1: i32) -> (i32, i32, i32) {
    %c0_i32 = arith.constant 0 : i32
    %c0_i32_0 = arith.constant 0 : i32
    return %arg0, %c0_i32, %arg1 : i32, i32, i32
  }
  func.func @transform_5(%arg0: i32, %arg1: i32) -> (i32, i32, i32) {
    %c0_i32 = arith.constant 0 : i32
    %c0_i32_0 = arith.constant 0 : i32
    return %arg0, %c0_i32, %arg1 : i32, i32, i32
  }
}

</mosaic_0001>

<llo_original>
// kernel: sigmoid_dot_attention.1
$region0: #{sigmoid_dot_attention.1}
  #allocation0 [shape = 'u32[]', space=smem, size = 0x4, offset = 0x4, fixed_abs, tag = 'smem constant byte address 0x4 - core index']
  #allocation1 [shape = 'u32[144,128]{1,0:T(1,128)}', space=vmem, size = 0x12000, scoped, tag = 'internal scratch']
  %s0 = inlined_call_operand.vmem [shape: f32[2,128,16], index: 0, kind: input, shape index: {}]
  %s1 = inlined_call_operand.vmem [shape: f32[2,1,128], index: 1, kind: input, shape index: {}]
  %s2 = inlined_call_operand.vmem [shape: f32[128,128], index: 2, kind: input, shape index: {}]
  %s3 = inlined_call_operand.vmem [shape: f32[128,1], index: 3, kind: input, shape index: {}]
  %s4 = inlined_call_operand.vmem [shape: f32[2,128,16], index: 4, kind: output, shape index: {0}]
  %s5 = inlined_call_operand.hbm [shape: f32[2,1,16], index: 5, kind: output, shape index: {1}]
  %6 = xla_tuple %s4, %s5
  %s7 = sld [smem:[#allocation0]]
  $region57: #{sigmoid_dot_attention.1} parent=0
    _
  %s9 = ssub.s32 1, %s7
  %s10 = scalar_select 0, %s9, %s7
  $region1: #{sigmoid_dot_attention.1} parent=0
    #allocation2 [shape = 'u8[1024]{0}', space=vmem, size = 0x400, scoped, tag = 'output window, operand 1']
    #allocation3 [shape = 's32[2]{0}', space=sflag, size = 0x8, scoped, tag = 'scoped memory for sigmoid_dot_attention.1']
    %11 = vsyncpa [#allocation3], 0
    %s12 = scalar_lea.sflag [#allocation3], 1
    %13 = vsyncpa %s12, 0
    loop: start=0, step=1, limit=4
    $region2: #{sigmoid_dot_attention.1} parent=1 // loop_pre_header
      _
    $region3: #{sigmoid_dot_attention.1} parent=1 // loop_header
      %s15 = sphi 0, %s19
      %p16 = scmp.ge.s32.totalorder %s15, 4
      %s22 = sphi 0, %s34
      %s23 = sphi 0, %s30
      %s24 = sphi 0, %s22
      %s25 = sphi 0, %s23
      %s26 = sphi 0, %s24
      %s27 = sphi 0, %s25
      %s39 = sphi 0, %s41
      %s42 = sphi 0, %s39
      %s43 = sphi 0, %s42
      %s59 = sphi 0, %s43
      %s65 = sphi 0, %s67
      %s68 = sphi 0, %s65
      %s69 = sphi 0, %s68
      %s85 = sphi 0, %s69
      %s89 = sphi 0, %s89
      %s91 = sphi 0, %s89
      %s92 = sphi 0, %s91
      %s106 = sphi 0, %s92
      %s110 = sphi 0, %s110
      %s112 = sphi 0, %s110
      %s113 = sphi 0, %s112
      %s127 = sphi 0, %s113
      %s135 = sphi 0, %s137
      %s138 = sphi 0, %s135
      %s139 = sphi 0, %s138
      %s155 = sphi 0, %s139
      %s163 = sphi 0, %s165
      %s166 = sphi 0, %s163
      %s167 = sphi 0, %s166
      %s183 = sphi 0, %s167
    $region4: #{sigmoid_dot_attention.1} parent=1 // loop_header_branch
      %18 = sbr.rel (%p16) target = $region8
    $region5: #{sigmoid_dot_attention.1} parent=1 // loop_body
      %s20 = ssub.s32 %s15, 1
      %s21 = ssub.s32 %s15, 2
      %s28 = sadd.s32 1, %s23
      %p29 = scmp.ge.s32.totalorder %s28, 1
      %s30 = scalar_select %p29, 0, %s28
      %s31 = sadd.s32 1, %s22
      %s32 = scalar_select %p29, %s31, %s22
      %p33 = scmp.ge.s32.totalorder %s32, 2
      %s34 = scalar_select %p33, 0, %s32
      %s35 = ssub.s32 %s22, %s34
      %s36 = ssub.s32 %s23, %s30
      %s37 = sor.u32 %s35, %s36
      %p38 = scmp.eq.s32.totalorder %s37, 0
      %s40 = sadd.s32 %s39, 1
      %s41 = scalar_select %p38, %s39, %s40
      %p44 = pneg %p38
      %p45 = scmp.eq.s32.totalorder %s15, 1
      %p46 = por %p44, %p45
      %p47 = scmp.ne.s32.totalorder %s39, %s42
      %p48 = scmp.eq.s32.totalorder %s15, 0
      %p49 = por %p47, %p48
      %p50 = scmp.ne.s32.totalorder %s39, %s42
      %p51 = scmp.eq.s32.totalorder %s20, 1
      %p52 = por %p50, %p51
      %p53 = scmp.ne.s32.totalorder %s42, %s43
      %p54 = scmp.eq.s32.totalorder %s20, 0
      %p55 = por %p53, %p54
      %p56 = scmp.ne.s32.totalorder %s42, %s43
      %p57 = scmp.eq.s32.totalorder %s21, 1
      %p58 = por %p56, %p57
      %p60 = scmp.ne.s32.totalorder %s43, %s59
      %p61 = scmp.eq.s32.totalorder %s21, 0
      %p62 = por %p60, %p61
      %s63 = ssub.s32 %s22, %s34
      %p64 = scmp.eq.s32.totalorder %s63, 0
      %s66 = sadd.s32 %s65, 1
      %s67 = scalar_select %p64, %s65, %s66
      %p70 = pneg %p64
      %p71 = scmp.eq.s32.totalorder %s15, 1
      %p72 = por %p70, %p71
      %p73 = scmp.ne.s32.totalorder %s65, %s68
      %p74 = scmp.eq.s32.totalorder %s15, 0
      %p75 = por %p73, %p74
      %p76 = scmp.ne.s32.totalorder %s65, %s68
      %p77 = scmp.eq.s32.totalorder %s20, 1
      %p78 = por %p76, %p77
      %p79 = scmp.ne.s32.totalorder %s68, %s69
      %p80 = scmp.eq.s32.totalorder %s20, 0
      %p81 = por %p79, %p80
      %p82 = scmp.ne.s32.totalorder %s68, %s69
      %p83 = scmp.eq.s32.totalorder %s21, 1
      %p84 = por %p82, %p83
      %p86 = scmp.ne.s32.totalorder %s69, %s85
      %p87 = scmp.eq.s32.totalorder %s21, 0
      %p88 = por %p86, %p87
      %s90 = sadd.s32 %s89, 1
      %p93 = scmp.eq.s32.totalorder %s15, 1
      %p94 = scmp.ne.s32.totalorder %s89, %s91
      %p95 = scmp.eq.s32.totalorder %s15, 0
      %p96 = por %p94, %p95
      %p97 = scmp.ne.s32.totalorder %s89, %s91
      %p98 = scmp.eq.s32.totalorder %s20, 1
      %p99 = por %p97, %p98
      %p100 = scmp.ne.s32.totalorder %s91, %s92
      %p101 = scmp.eq.s32.totalorder %s20, 0
      %p102 = por %p100, %p101
      %p103 = scmp.ne.s32.totalorder %s91, %s92
      %p104 = scmp.eq.s32.totalorder %s21, 1
      %p105 = por %p103, %p104
      %p107 = scmp.ne.s32.totalorder %s92, %s106
      %p108 = scmp.eq.s32.totalorder %s21, 0
      %p109 = por %p107, %p108
      %s111 = sadd.s32 %s110, 1
      %p114 = scmp.eq.s32.totalorder %s15, 1
      %p115 = scmp.ne.s32.totalorder %s110, %s112
      %p116 = scmp.eq.s32.totalorder %s15, 0
      %p117 = por %p115, %p116
      %p118 = scmp.ne.s32.totalorder %s110, %s112
      %p119 = scmp.eq.s32.totalorder %s20, 1
      %p120 = por %p118, %p119
      %p121 = scmp.ne.s32.totalorder %s112, %s113
      %p122 = scmp.eq.s32.totalorder %s20, 0
      %p123 = por %p121, %p122
      %p124 = scmp.ne.s32.totalorder %s112, %s113
      %p125 = scmp.eq.s32.totalorder %s21, 1
      %p126 = por %p124, %p125
      %p128 = scmp.ne.s32.totalorder %s113, %s127
      %p129 = scmp.eq.s32.totalorder %s21, 0
      %p130 = por %p128, %p129
      %s131 = ssub.s32 %s22, %s34
      %s132 = ssub.s32 %s23, %s30
      %s133 = sor.u32 %s131, %s132
      %p134 = scmp.eq.s32.totalorder %s133, 0
      %s136 = sadd.s32 %s135, 1
      %s137 = scalar_select %p134, %s135, %s136
      %p140 = pneg %p134
      %p141 = scmp.eq.s32.totalorder %s15, 1
      %p142 = por %p140, %p141
      %p143 = scmp.ne.s32.totalorder %s135, %s138
      %p144 = scmp.eq.s32.totalorder %s15, 0
      %p145 = por %p143, %p144
      %p146 = scmp.ne.s32.totalorder %s135, %s138
      %p147 = scmp.eq.s32.totalorder %s20, 1
      %p148 = por %p146, %p147
      %p149 = scmp.ne.s32.totalorder %s138, %s139
      %p150 = scmp.eq.s32.totalorder %s20, 0
      %p151 = por %p149, %p150
      %p152 = scmp.ne.s32.totalorder %s138, %s139
      %p153 = scmp.eq.s32.totalorder %s21, 1
      %p154 = por %p152, %p153
      %p156 = scmp.ne.s32.totalorder %s139, %s155
      %p157 = scmp.eq.s32.totalorder %s21, 0
      %p158 = por %p156, %p157
      %s159 = ssub.s32 %s22, %s34
      %s160 = ssub.s32 %s23, %s30
      %s161 = sor.u32 %s159, %s160
      %p162 = scmp.eq.s32.totalorder %s161, 0
      %s164 = sadd.s32 %s163, 1
      %s165 = scalar_select %p162, %s163, %s164
      %p168 = pneg %p162
      %p169 = scmp.eq.s32.totalorder %s15, 1
      %p170 = por %p168, %p169
      %p171 = scmp.ne.s32.totalorder %s163, %s166
      %p172 = scmp.eq.s32.totalorder %s15, 0
      %p173 = por %p171, %p172
      %p174 = scmp.ne.s32.totalorder %s163, %s166
      %p175 = scmp.eq.s32.totalorder %s20, 1
      %p176 = por %p174, %p175
      %p177 = scmp.ne.s32.totalorder %s166, %s167
      %p178 = scmp.eq.s32.totalorder %s20, 0
      %p179 = por %p177, %p178
      %p180 = scmp.ne.s32.totalorder %s166, %s167
      %p181 = scmp.eq.s32.totalorder %s21, 1
      %p182 = por %p180, %p181
      %p184 = scmp.ne.s32.totalorder %s167, %s183
      %p185 = scmp.eq.s32.totalorder %s21, 0
      %p186 = por %p184, %p185
      %p187 = scmp.le.s32.totalorder 1, %s15
      %p188 = scmp.lt.s32.totalorder %s15, 3
      %p189 = pnand %p187, %p188
      %p190 = pneg %p189
      // Predicated region
      $region9: #{sigmoid_dot_attention.1} parent=5 // pred_check
        _
      $region10: #{sigmoid_dot_attention.1} parent=5 // pred_check_branch
        %192 = sbr.rel (%p189) target = $region12
      $region11: #{sigmoid_dot_attention.1} parent=5 // pred_region
        %s193 = ssub.s32 %s15, 1
        // Predicated region
        $region13: #{sigmoid_dot_attention.1} parent=11 // pred_check
          %p194 = pneg %p102
        $region14: #{sigmoid_dot_attention.1} parent=11 // pred_check_branch
          %196 = sbr.rel (%p194) target = $region16
        $region15: #{sigmoid_dot_attention.1} parent=11 // pred_region
          _
        $region16: #{sigmoid_dot_attention.1} parent=11 // pred_fallthru
          _
        // Predicated region
        $region17: #{sigmoid_dot_attention.1} parent=11 // pred_check
          %p197 = pneg %p123
        $region18: #{sigmoid_dot_attention.1} parent=11 // pred_check_branch
          %199 = sbr.rel (%p197) target = $region20
        $region19: #{sigmoid_dot_attention.1} parent=11 // pred_region
          _
        $region20: #{sigmoid_dot_attention.1} parent=11 // pred_fallthru
          _
      $region12: #{sigmoid_dot_attention.1} parent=5 // pred_fallthru
        _
      %p200 = scmp.lt.s32.totalorder %s15, 2
      // Predicated region
      $region21: #{sigmoid_dot_attention.1} parent=5 // pred_check
        %p201 = pneg %p200
      $region22: #{sigmoid_dot_attention.1} parent=5 // pred_check_branch
        %203 = sbr.rel (%p201) target = $region24
      $region23: #{sigmoid_dot_attention.1} parent=5 // pred_region
        // Predicated region
        $region25: #{sigmoid_dot_attention.1} parent=23 // pred_check
          %p204 = pneg %p49
        $region26: #{sigmoid_dot_attention.1} parent=23 // pred_check_branch
          %206 = sbr.rel (%p204) target = $region28
        $region27: #{sigmoid_dot_attention.1} parent=23 // pred_region
          %p207 = scmp.lt.s32.totalorder %s22, 1
          %s208 = scalar_select %p207, %s22, 1
          %p209 = scmp.lt.s32.totalorder %s23, 0
          %s210 = scalar_select %p209, %s23, 0
          %s211 = smul.addr %s208, 16
          %s212 = sadd.s32 %s210, %s211
          %s213 = smul.addr %s212, 8
          %s214 = scalar_lea.vmem %s0, %s213
        $region28: #{sigmoid_dot_attention.1} parent=23 // pred_fallthru
          _
        // Predicated region
        $region29: #{sigmoid_dot_attention.1} parent=23 // pred_check
          %p215 = pneg %p75
        $region30: #{sigmoid_dot_attention.1} parent=23 // pred_check_branch
          %217 = sbr.rel (%p215) target = $region32
        $region31: #{sigmoid_dot_attention.1} parent=23 // pred_region
          %p218 = scmp.lt.s32.totalorder %s22, 1
          %s219 = scalar_select %p218, %s22, 1
          %s220 = scalar_lea.vmem %s1, %s219
        $region32: #{sigmoid_dot_attention.1} parent=23 // pred_fallthru
          _
      $region24: #{sigmoid_dot_attention.1} parent=5 // pred_fallthru
        _
      %p221 = scmp.le.s32.totalorder 1, %s15
      %p222 = scmp.lt.s32.totalorder %s15, 3
      %p223 = pnand %p221, %p222
      %p224 = pneg %p223
      // Predicated region
      $region33: #{sigmoid_dot_attention.1} parent=5 // pred_check
        _
      $region34: #{sigmoid_dot_attention.1} parent=5 // pred_check_branch
        %226 = sbr.rel (%p223) target = $region36
      $region35: #{sigmoid_dot_attention.1} parent=5 // pred_region
        %s227 = ssub.s32 %s15, 1
        %p228 = scmp.lt.s32.totalorder %s24, 1
        %s229 = scalar_select %p228, %s24, 1
        %p230 = scmp.lt.s32.totalorder %s25, 0
        %s231 = scalar_select %p230, %s25, 0
        %s232 = smul.addr %s229, 16
        %s233 = sadd.s32 %s231, %s232
        %s234 = smul.addr %s233, 8
        %s235 = scalar_lea.vmem %s0, %s234
        %p236 = pneg %p55
        %p237 = pneg %p52
        %p238 = scmp.lt.s32.totalorder %s24, 1
        %s239 = scalar_select %p238, %s24, 1
        %s240 = scalar_lea.vmem %s1, %s239
        %p241 = pneg %p81
        %p242 = pneg %p78
        %p243 = pneg %p102
        %p244 = pneg %p99
        %p245 = pneg %p123
        %p246 = pneg %p120
        %p247 = pneg %p151
        %p248 = pneg %p148
        %p249 = scmp.lt.s32.totalorder %s24, 1
        %s250 = scalar_select %p249, %s24, 1
        %p251 = scmp.lt.s32.totalorder %s25, 0
        %s252 = scalar_select %p251, %s25, 0
        %s253 = smul.addr %s250, 16
        %s254 = sadd.s32 %s252, %s253
        %s255 = smul.addr %s254, 8
        %s256 = scalar_lea.vmem %s4, %s255
        %p257 = pneg %p179
        %p258 = pneg %p176
        %s259 = sand.u32 %s166, 1
        %s260 = scalar_lea.sflag [#allocation3], %s259
        %s261 = sand.u32 %s166, 1
        %s262 = scalar_lea.vmem [#allocation2], %s261
        %p263 = scmp.lt.s32.totalorder %s24, 1
        %s264 = scalar_select %p263, %s24, 1
        %p265 = scmp.lt.s32.totalorder %s25, 0
        %s266 = scalar_select %p265, %s25, 0
        %s267 = smul.addr %s264, 16
        %s268 = sadd.s32 %s266, %s267
        %s269 = smul.addr %s268, 8
        %s270 = scalar_lea.vmem %s0, %s269
        %p271 = scmp.lt.s32.totalorder %s24, 1
        %s272 = scalar_select %p271, %s24, 1
        %s273 = scalar_lea.vmem %s1, %s272
        %p274 = scmp.lt.s32.totalorder %s24, 1
        %s275 = scalar_select %p274, %s24, 1
        %p276 = scmp.lt.s32.totalorder %s25, 0
        %s277 = scalar_select %p276, %s25, 0
        %s278 = smul.addr %s275, 16
        %s279 = sadd.s32 %s277, %s278
        %s280 = smul.addr %s279, 8
        %s281 = scalar_lea.vmem %s4, %s280
        %v282 = vld [vmem:[%s2] sm:$0xff]
        %v283 = vld [vmem:[%s2 + $0x8] sm:$0xff]
        %v284 = vld [vmem:[%s2 + $0x10] sm:$0xff]
        %v285 = vld [vmem:[%s2 + $0x18] sm:$0xff]
        %v286 = vld [vmem:[%s2 + $0x20] sm:$0xff]
        %v287 = vld [vmem:[%s2 + $0x28] sm:$0xff]
        %v288 = vld [vmem:[%s2 + $0x30] sm:$0xff]
        %v289 = vld [vmem:[%s2 + $0x38] sm:$0xff]
        %v290 = vld [vmem:[%s2 + $0x40] sm:$0xff]
        %v291 = vld [vmem:[%s2 + $0x48] sm:$0xff]
        %v292 = vld [vmem:[%s2 + $0x50] sm:$0xff]
        %v293 = vld [vmem:[%s2 + $0x58] sm:$0xff]
        %v294 = vld [vmem:[%s2 + $0x60] sm:$0xff]
        %v295 = vld [vmem:[%s2 + $0x68] sm:$0xff]
        %v296 = vld [vmem:[%s2 + $0x70] sm:$0xff]
        %v297 = vld [vmem:[%s2 + $0x78] sm:$0xff]
        %v298 = vld [vmem:[%s3] sm:$0xff]
        %v299 = vld [vmem:[%s3 + $0x8] sm:$0xff]
        %v300 = vld [vmem:[%s3 + $0x10] sm:$0xff]
        %v301 = vld [vmem:[%s3 + $0x18] sm:$0xff]
        %v302 = vld [vmem:[%s3 + $0x20] sm:$0xff]
        %v303 = vld [vmem:[%s3 + $0x28] sm:$0xff]
        %v304 = vld [vmem:[%s3 + $0x30] sm:$0xff]
        %v305 = vld [vmem:[%s3 + $0x38] sm:$0xff]
        %v306 = vld [vmem:[%s3 + $0x40] sm:$0xff]
        %v307 = vld [vmem:[%s3 + $0x48] sm:$0xff]
        %v308 = vld [vmem:[%s3 + $0x50] sm:$0xff]
        %v309 = vld [vmem:[%s3 + $0x58] sm:$0xff]
        %v310 = vld [vmem:[%s3 + $0x60] sm:$0xff]
        %v311 = vld [vmem:[%s3 + $0x68] sm:$0xff]
        %v312 = vld [vmem:[%s3 + $0x70] sm:$0xff]
        %v313 = vld [vmem:[%s3 + $0x78] sm:$0xff]
        %v314 = vld [vmem:[%s270] sm:$0xff]
        %v315 = vld [vmem:[%s270 + $0x8] sm:$0xff]
        %v316 = vld [vmem:[%s270 + $0x10] sm:$0xff]
        %v317 = vld [vmem:[%s270 + $0x18] sm:$0xff]
        %v318 = vld [vmem:[%s270 + $0x20] sm:$0xff]
        %v319 = vld [vmem:[%s270 + $0x28] sm:$0xff]
        %v320 = vld [vmem:[%s270 + $0x30] sm:$0xff]
        %v321 = vld [vmem:[%s270 + $0x38] sm:$0xff]
        %v322 = vld [vmem:[%s270 + $0x40] sm:$0xff]
        %v323 = vld [vmem:[%s270 + $0x48] sm:$0xff]
        %v324 = vld [vmem:[%s270 + $0x50] sm:$0xff]
        %v325 = vld [vmem:[%s270 + $0x58] sm:$0xff]
        %v326 = vld [vmem:[%s270 + $0x60] sm:$0xff]
        %v327 = vld [vmem:[%s270 + $0x68] sm:$0xff]
        %v328 = vld [vmem:[%s270 + $0x70] sm:$0xff]
        %v329 = vld [vmem:[%s270 + $0x78] sm:$0xff]
        %331 = vset.pattern.permute.xlu0 0
        %332 = vperm.xlu0 %331, %v298
        %v333 = vpop.permute.xlu0 %332
        %336 = vset.pattern.permute.xlu0 0
        %337 = vperm.xlu0 %336, %v299
        %v338 = vpop.permute.xlu0 %337
        %341 = vset.pattern.permute.xlu0 0
        %342 = vperm.xlu0 %341, %v300
        %v343 = vpop.permute.xlu0 %342
        %346 = vset.pattern.permute.xlu0 0
        %347 = vperm.xlu0 %346, %v301
        %v348 = vpop.permute.xlu0 %347
        %351 = vset.pattern.permute.xlu0 0
        %352 = vperm.xlu0 %351, %v302
        %v353 = vpop.permute.xlu0 %352
        %356 = vset.pattern.permute.xlu0 0
        %357 = vperm.xlu0 %356, %v303
        %v358 = vpop.permute.xlu0 %357
        %361 = vset.pattern.permute.xlu0 0
        %362 = vperm.xlu0 %361, %v304
        %v363 = vpop.permute.xlu0 %362
        %366 = vset.pattern.permute.xlu0 0
        %367 = vperm.xlu0 %366, %v305
        %v368 = vpop.permute.xlu0 %367
        %371 = vset.pattern.permute.xlu0 0
        %372 = vperm.xlu0 %371, %v306
        %v373 = vpop.permute.xlu0 %372
        %376 = vset.pattern.permute.xlu0 0
        %377 = vperm.xlu0 %376, %v307
        %v378 = vpop.permute.xlu0 %377
        %381 = vset.pattern.permute.xlu0 0
        %382 = vperm.xlu0 %381, %v308
        %v383 = vpop.permute.xlu0 %382
        %386 = vset.pattern.permute.xlu0 0
        %387 = vperm.xlu0 %386, %v309
        %v388 = vpop.permute.xlu0 %387
        %391 = vset.pattern.permute.xlu0 0
        %392 = vperm.xlu0 %391, %v310
        %v393 = vpop.permute.xlu0 %392
        %396 = vset.pattern.permute.xlu0 0
        %397 = vperm.xlu0 %396, %v311
        %v398 = vpop.permute.xlu0 %397
        %401 = vset.pattern.permute.xlu0 0
        %402 = vperm.xlu0 %401, %v312
        %v403 = vpop.permute.xlu0 %402
        %406 = vset.pattern.permute.xlu0 0
        %407 = vperm.xlu0 %406, %v313
        %v408 = vpop.permute.xlu0 %407
        %410 = vmatprep.subr.mxu0 0.0
        %411 = vmatpush1.msra.mxu0 %v329
        %412 = vmatprep.subr.mxu0 0.0
        %413 = vmatpush1.msra.mxu0 %v328
        %414 = vmatprep.subr.mxu0 0.0
        %415 = vmatpush1.msra.mxu0 %v327
        %416 = vmatprep.subr.mxu0 0.0
        %417 = vmatpush1.msra.mxu0 %v326
        %418 = vmatprep.subr.mxu0 0.0
        %419 = vmatpush1.msra.mxu0 %v325
        %420 = vmatprep.subr.mxu0 0.0
        %421 = vmatpush1.msra.mxu0 %v324
        %422 = vmatprep.subr.mxu0 0.0
        %423 = vmatpush1.msra.mxu0 %v323
        %424 = vmatprep.subr.mxu0 0.0
        %425 = vmatpush1.msra.mxu0 %v322
        %426 = vmatprep.subr.mxu0 0.0
        %427 = vmatpush1.msra.mxu0 %v321
        %428 = vmatprep.subr.mxu0 0.0
        %429 = vmatpush1.msra.mxu0 %v320
        %430 = vmatprep.subr.mxu0 0.0
        %431 = vmatpush1.msra.mxu0 %v319
        %432 = vmatprep.subr.mxu0 0.0
        %433 = vmatpush1.msra.mxu0 %v318
        %434 = vmatprep.subr.mxu0 0.0
        %435 = vmatpush1.msra.mxu0 %v317
        %436 = vmatprep.subr.mxu0 0.0
        %437 = vmatpush1.msra.mxu0 %v316
        %438 = vmatprep.subr.mxu0 0.0
        %439 = vmatpush1.msra.mxu0 %v315
        %440 = vmatprep.subr.mxu0 0.0
        %441 = vmatpush1.msra.mxu0 %v314
        %442 = vmatprep.subr.mxu0 0.0
        %443 = vmatpush2.msra.mxu0 0.0
        %444 = vmatprep.subr.mxu0 0.0
        %445 = vmatpush2.msra.mxu0 0.0
        %446 = vmatprep.subr.mxu0 0.0
        %447 = vmatpush2.msra.mxu0 0.0
        %448 = vmatprep.subr.mxu0 0.0
        %449 = vmatpush2.msra.mxu0 0.0
        %450 = vmatprep.subr.mxu0 0.0
        %451 = vmatpush2.msra.mxu0 0.0
        %452 = vmatprep.subr.mxu0 0.0
        %453 = vmatpush2.msra.mxu0 0.0
        %454 = vmatprep.subr.mxu0 0.0
        %455 = vmatpush2.msra.mxu0 0.0
        %456 = vmatprep.subr.mxu0 0.0
        %457 = vmatpush2.msra.mxu0 0.0
        %458 = vmatprep.subr.mxu0 0.0
        %459 = vmatpush2.msra.mxu0 0.0
        %460 = vmatprep.subr.mxu0 0.0
        %461 = vmatpush2.msra.mxu0 0.0
        %462 = vmatprep.subr.mxu0 0.0
        %463 = vmatpush2.msra.mxu0 0.0
        %464 = vmatprep.subr.mxu0 0.0
        %465 = vmatpush2.msra.mxu0 0.0
        %466 = vmatprep.subr.mxu0 0.0
        %467 = vmatpush2.msra.mxu0 0.0
        %468 = vmatprep.subr.mxu0 0.0
        %469 = vmatpush2.msra.mxu0 0.0
        %470 = vmatprep.subr.mxu0 0.0
        %471 = vmatpush2.msra.mxu0 0.0
        %472 = vmatprep.subr.mxu0 0.0
        %473 = vmatpush2.msra.mxu0 0.0
        %474 = vmatprep.mubr.f32.mxu0 0.0
        %475 = vmatmul.mubr.f32.gmra.mxu0 %v282
        %v476 = vpop.f32.mrf.mxu0
        %v477 = vadd.f32 %v333, %v476
        %v478 = vpop.f32.mrf.mxu0
        %479 = vmatprep.mubr.f32.mxu0 0.0
        %480 = vmatmul.mubr.f32.gmra.mxu0 %v283
        %v481 = vpop.f32.mrf.mxu0
        %v482 = vadd.f32 %v338, %v481
        %v483 = vpop.f32.mrf.mxu0
        %484 = vmatprep.mubr.f32.mxu0 0.0
        %485 = vmatmul.mubr.f32.gmra.mxu0 %v284
        %v486 = vpop.f32.mrf.mxu0
        %v487 = vadd.f32 %v343, %v486
        %v488 = vpop.f32.mrf.mxu0
        %489 = vmatprep.mubr.f32.mxu0 0.0
        %490 = vmatmul.mubr.f32.gmra.mxu0 %v285
        %v491 = vpop.f32.mrf.mxu0
        %v492 = vadd.f32 %v348, %v491
        %v493 = vpop.f32.mrf.mxu0
        %494 = vmatprep.mubr.f32.mxu0 0.0
        %495 = vmatmul.mubr.f32.gmra.mxu0 %v286
        %v496 = vpop.f32.mrf.mxu0
        %v497 = vadd.f32 %v353, %v496
        %v498 = vpop.f32.mrf.mxu0
        %499 = vmatprep.mubr.f32.mxu0 0.0
        %500 = vmatmul.mubr.f32.gmra.mxu0 %v287
        %v501 = vpop.f32.mrf.mxu0
        %v502 = vadd.f32 %v358, %v501
        %v503 = vpop.f32.mrf.mxu0
        %504 = vmatprep.mubr.f32.mxu0 0.0
        %505 = vmatmul.mubr.f32.gmra.mxu0 %v288
        %v506 = vpop.f32.mrf.mxu0
        %v507 = vadd.f32 %v363, %v506
        %v508 = vpop.f32.mrf.mxu0
        %509 = vmatprep.mubr.f32.mxu0 0.0
        %510 = vmatmul.mubr.f32.gmra.mxu0 %v289
        %v511 = vpop.f32.mrf.mxu0
        %v512 = vadd.f32 %v368, %v511
        %v513 = vpop.f32.mrf.mxu0
        %514 = vmatprep.mubr.f32.mxu0 0.0
        %515 = vmatmul.mubr.f32.gmra.mxu0 %v290
        %v516 = vpop.f32.mrf.mxu0
        %v517 = vadd.f32 %v373, %v516
        %v518 = vpop.f32.mrf.mxu0
        %519 = vmatprep.mubr.f32.mxu0 0.0
        %520 = vmatmul.mubr.f32.gmra.mxu0 %v291
        %v521 = vpop.f32.mrf.mxu0
        %v522 = vadd.f32 %v378, %v521
        %v523 = vpop.f32.mrf.mxu0
        %524 = vmatprep.mubr.f32.mxu0 0.0
        %525 = vmatmul.mubr.f32.gmra.mxu0 %v292
        %v526 = vpop.f32.mrf.mxu0
        %v527 = vadd.f32 %v383, %v526
        %v528 = vpop.f32.mrf.mxu0
        %529 = vmatprep.mubr.f32.mxu0 0.0
        %530 = vmatmul.mubr.f32.gmra.mxu0 %v293
        %v531 = vpop.f32.mrf.mxu0
        %v532 = vadd.f32 %v388, %v531
        %v533 = vpop.f32.mrf.mxu0
        %534 = vmatprep.mubr.f32.mxu0 0.0
        %535 = vmatmul.mubr.f32.gmra.mxu0 %v294
        %v536 = vpop.f32.mrf.mxu0
        %v537 = vadd.f32 %v393, %v536
        %v538 = vpop.f32.mrf.mxu0
        %539 = vmatprep.mubr.f32.mxu0 0.0
        %540 = vmatmul.mubr.f32.gmra.mxu0 %v295
        %v541 = vpop.f32.mrf.mxu0
        %v542 = vadd.f32 %v398, %v541
        %v543 = vpop.f32.mrf.mxu0
        %544 = vmatprep.mubr.f32.mxu0 0.0
        %545 = vmatmul.mubr.f32.gmra.mxu0 %v296
        %v546 = vpop.f32.mrf.mxu0
        %v547 = vadd.f32 %v403, %v546
        %v548 = vpop.f32.mrf.mxu0
        %549 = vmatprep.mubr.f32.mxu0 0.0
        %550 = vmatmul.mubr.f32.gmra.mxu0 %v297
        %v551 = vpop.f32.mrf.mxu0
        %v552 = vadd.f32 %v408, %v551
        %v553 = vpop.f32.mrf.mxu0
        %554 = vdwg.mxu0
        %v555 = vld [vmem:[%s273] sm:$0x1]
        %556 = vmatprep.subr.mxu0 0.0
        %557 = vmatpush1.msra.mxu0 %v552
        %558 = vmatprep.subr.mxu0 0.0
        %559 = vmatpush1.msra.mxu0 %v547
        %560 = vmatprep.subr.mxu0 0.0
        %561 = vmatpush1.msra.mxu0 %v542
        %562 = vmatprep.subr.mxu0 0.0
        %563 = vmatpush1.msra.mxu0 %v537
        %564 = vmatprep.subr.mxu0 0.0
        %565 = vmatpush1.msra.mxu0 %v532
        %566 = vmatprep.subr.mxu0 0.0
        %567 = vmatpush1.msra.mxu0 %v527
        %568 = vmatprep.subr.mxu0 0.0
        %569 = vmatpush1.msra.mxu0 %v522
        %570 = vmatprep.subr.mxu0 0.0
        %571 = vmatpush1.msra.mxu0 %v517
        %572 = vmatprep.subr.mxu0 0.0
        %573 = vmatpush1.msra.mxu0 %v512
        %574 = vmatprep.subr.mxu0 0.0
        %575 = vmatpush1.msra.mxu0 %v507
        %576 = vmatprep.subr.mxu0 0.0
        %577 = vmatpush1.msra.mxu0 %v502
        %578 = vmatprep.subr.mxu0 0.0
        %579 = vmatpush1.msra.mxu0 %v497
        %580 = vmatprep.subr.mxu0 0.0
        %581 = vmatpush1.msra.mxu0 %v492
        %582 = vmatprep.subr.mxu0 0.0
        %583 = vmatpush1.msra.mxu0 %v487
        %584 = vmatprep.subr.mxu0 0.0
        %585 = vmatpush1.msra.mxu0 %v482
        %586 = vmatprep.subr.mxu0 0.0
        %587 = vmatpush1.msra.mxu0 %v477
        %588 = vmatprep.subr.mxu0 0.0
        %589 = vmatpush2.msra.mxu0 0.0
        %590 = vmatprep.subr.mxu0 0.0
        %591 = vmatpush2.msra.mxu0 0.0
        %592 = vmatprep.subr.mxu0 0.0
        %593 = vmatpush2.msra.mxu0 0.0
        %594 = vmatprep.subr.mxu0 0.0
        %595 = vmatpush2.msra.mxu0 0.0
        %596 = vmatprep.subr.mxu0 0.0
        %597 = vmatpush2.msra.mxu0 0.0
        %598 = vmatprep.subr.mxu0 0.0
        %599 = vmatpush2.msra.mxu0 0.0
        %600 = vmatprep.subr.mxu0 0.0
        %601 = vmatpush2.msra.mxu0 0.0
        %602 = vmatprep.subr.mxu0 0.0
        %603 = vmatpush2.msra.mxu0 0.0
        %604 = vmatprep.subr.mxu0 0.0
        %605 = vmatpush2.msra.mxu0 0.0
        %606 = vmatprep.subr.mxu0 0.0
        %607 = vmatpush2.msra.mxu0 0.0
        %608 = vmatprep.subr.mxu0 0.0
        %609 = vmatpush2.msra.mxu0 0.0
        %610 = vmatprep.subr.mxu0 0.0
        %611 = vmatpush2.msra.mxu0 0.0
        %612 = vmatprep.subr.mxu0 0.0
        %613 = vmatpush2.msra.mxu0 0.0
        %614 = vmatprep.subr.mxu0 0.0
        %615 = vmatpush2.msra.mxu0 0.0
        %616 = vmatprep.subr.mxu0 0.0
        %617 = vmatpush2.msra.mxu0 0.0
        %618 = vmatprep.subr.mxu0 0.0
        %619 = vmatpush2.msra.mxu0 0.0
        %620 = vmatprep.mubr.f32.mxu0 0.0
        %621 = vmatmul.mubr.f32.gmra.mxu0 %v555
        %v622 = vpop.f32.mrf.mxu0
        %v623 = vadd.f32 0.0, %v622
        %v624 = vpop.f32.mrf.mxu0
        %625 = vdwg.mxu0
        %v626 = vsub.f32 0.0, %v623
        %v627 = vmul.f32 %v626, 1.442695
        %v628 = vpow.pop %v627
        %v629 = vadd.f32 %v628, 1.0
        %v630 = vrcp.pop %v629
        %v631 = vmul.f32 1.0, %v630
        %v632 = vlaneseq
        %v633 = vshrl.u32 %v632, 7
        %v634 = vsub.s32 0, %v633
        %v635 = vrot.slane %v631, %v634
        %v636 = vmul.f32 %v477, %v635
        %v637 = vmul.f32 %v482, %v635
        %v638 = vmul.f32 %v487, %v635
        %v639 = vmul.f32 %v492, %v635
        %v640 = vmul.f32 %v497, %v635
        %v641 = vmul.f32 %v502, %v635
        %v642 = vmul.f32 %v507, %v635
        %v643 = vmul.f32 %v512, %v635
        %v644 = vmul.f32 %v517, %v635
        %v645 = vmul.f32 %v522, %v635
        %v646 = vmul.f32 %v527, %v635
        %v647 = vmul.f32 %v532, %v635
        %v648 = vmul.f32 %v537, %v635
        %v649 = vmul.f32 %v542, %v635
        %v650 = vmul.f32 %v547, %v635
        %v651 = vmul.f32 %v552, %v635
        %vm652 = vcmask 130048
        %653 = vst.msk [vmem:[%s281] sm:$0xff] %vm652, %v636
        %654 = vst.msk [vmem:[%s281 + $0x8] sm:$0xff] %vm652, %v637
        %655 = vst.msk [vmem:[%s281 + $0x10] sm:$0xff] %vm652, %v638
        %656 = vst.msk [vmem:[%s281 + $0x18] sm:$0xff] %vm652, %v639
        %657 = vst.msk [vmem:[%s281 + $0x20] sm:$0xff] %vm652, %v640
        %658 = vst.msk [vmem:[%s281 + $0x28] sm:$0xff] %vm652, %v641
        %659 = vst.msk [vmem:[%s281 + $0x30] sm:$0xff] %vm652, %v642
        %660 = vst.msk [vmem:[%s281 + $0x38] sm:$0xff] %vm652, %v643
        %661 = vst.msk [vmem:[%s281 + $0x40] sm:$0xff] %vm652, %v644
        %662 = vst.msk [vmem:[%s281 + $0x48] sm:$0xff] %vm652, %v645
        %663 = vst.msk [vmem:[%s281 + $0x50] sm:$0xff] %vm652, %v646
        %664 = vst.msk [vmem:[%s281 + $0x58] sm:$0xff] %vm652, %v647
        %665 = vst.msk [vmem:[%s281 + $0x60] sm:$0xff] %vm652, %v648
        %666 = vst.msk [vmem:[%s281 + $0x68] sm:$0xff] %vm652, %v649
        %667 = vst.msk [vmem:[%s281 + $0x70] sm:$0xff] %vm652, %v650
        %668 = vst.msk [vmem:[%s281 + $0x78] sm:$0xff] %vm652, %v651
        %vm669 = vcmask 122880
        %670 = vst.msk [vmem:[%s262] sm:$0x1] %vm669, %v631
        %p671 = scmp.lt.s32.totalorder %s24, 1
        %s672 = scalar_select %p671, %s24, 1
        %p673 = scmp.lt.s32.totalorder %s25, 0
        %s674 = scalar_select %p673, %s25, 0
        %s675 = smul.addr %s672, 16
        %s676 = sadd.s32 %s674, %s675
        %s677 = smul.addr %s676, 8
        %s678 = scalar_lea.vmem %s4, %s677
        %s679 = sand.u32 %s166, 1
        %s680 = scalar_lea.sflag [#allocation3], %s679
        %s681 = sand.u32 %s166, 1
        %s682 = scalar_lea.vmem [#allocation2], %s681
        // Predicated region
        $region37: #{sigmoid_dot_attention.1} parent=35 // pred_check
          %p683 = pneg %p148
        $region38: #{sigmoid_dot_attention.1} parent=35 // pred_check_branch
          %685 = sbr.rel (%p683) target = $region40
        $region39: #{sigmoid_dot_attention.1} parent=35 // pred_region
          _
        $region40: #{sigmoid_dot_attention.1} parent=35 // pred_fallthru
          _
        // Predicated region
        $region41: #{sigmoid_dot_attention.1} parent=35 // pred_check
          %p686 = pneg %p176
        $region42: #{sigmoid_dot_attention.1} parent=35 // pred_check_branch
          %688 = sbr.rel (%p686) target = $region44
        $region43: #{sigmoid_dot_attention.1} parent=35 // pred_region
          %s690 = ssub.s32 16, 16
          %691 = vsyncadd %s680, %s690
          %s692 = sadd.s32 %s25, %s24
          %s693 = smul.addr %s692, 16
          %s694 = scalar_lea.hbm %s5, %s693
          %s696 = sshll.u32 %s682, 4
          %s697 = int_to_ptr.vmem [resolvable:$true] %s696
          %699 = dma.vmem_to_hbm [thread:$0]  %s697, 16, %s694, %s680
        $region44: #{sigmoid_dot_attention.1} parent=35 // pred_fallthru
          _
      $region36: #{sigmoid_dot_attention.1} parent=5 // pred_fallthru
        _
      %p700 = scmp.le.s32.totalorder 2, %s15
      // Predicated region
      $region45: #{sigmoid_dot_attention.1} parent=5 // pred_check
        %p701 = pneg %p700
      $region46: #{sigmoid_dot_attention.1} parent=5 // pred_check_branch
        %703 = sbr.rel (%p701) target = $region48
      $region47: #{sigmoid_dot_attention.1} parent=5 // pred_region
        %s704 = ssub.s32 %s15, 2
        // Predicated region
        $region49: #{sigmoid_dot_attention.1} parent=47 // pred_check
          %p705 = pneg %p154
        $region50: #{sigmoid_dot_attention.1} parent=47 // pred_check_branch
          %707 = sbr.rel (%p705) target = $region52
        $region51: #{sigmoid_dot_attention.1} parent=47 // pred_region
          %p708 = scmp.lt.s32.totalorder %s26, 1
          %s709 = scalar_select %p708, %s26, 1
          %p710 = scmp.lt.s32.totalorder %s27, 0
          %s711 = scalar_select %p710, %s27, 0
          %s712 = smul.addr %s709, 16
          %s713 = sadd.s32 %s711, %s712
          %s714 = smul.addr %s713, 8
          %s715 = scalar_lea.vmem %s4, %s714
        $region52: #{sigmoid_dot_attention.1} parent=47 // pred_fallthru
          _
        // Predicated region
        $region53: #{sigmoid_dot_attention.1} parent=47 // pred_check
          %p716 = pneg %p182
        $region54: #{sigmoid_dot_attention.1} parent=47 // pred_check_branch
          %718 = sbr.rel (%p716) target = $region56
        $region55: #{sigmoid_dot_attention.1} parent=47 // pred_region
          %s719 = sand.u32 %s167, 1
          %s720 = scalar_lea.sflag [#allocation3], %s719
          %s721 = sand.u32 %s167, 1
          %s722 = scalar_lea.vmem [#allocation2], %s721
          %723 = dma.done %s720, 16
        $region56: #{sigmoid_dot_attention.1} parent=47 // pred_fallthru
          _
      $region48: #{sigmoid_dot_attention.1} parent=5 // pred_fallthru
        _
    $region6: #{sigmoid_dot_attention.1} parent=1 // loop_footer
      %s19 = sadd.s32 1, %s15
    $region7: #{sigmoid_dot_attention.1} parent=1 // loop_footer_branch
      %14 = sbr.rel target = $region3
    $region8: #{sigmoid_dot_attention.1} parent=1 // loop_exit
      _
    %724 = vsyncpa [#allocation3], 1
    %s725 = scalar_lea.sflag [#allocation3], 1
    %726 = vsyncpa %s725, 1

</llo_original>
